<compile_context>
chip_gen: v5e
topology: v5e:2x2
jax: 0.10.0
libtpu: 0.0.40
codegen_flags: <defaults>
</compile_context>

<pallas_src>
import functools
import math

import jax
import jax.numpy as jnp
from jax.experimental import pallas as pl
from jax.experimental.pallas import tpu as pltpu


def bigcn_kernel(beta_ref, y1_ref, y2_ref, z_ref, l_ref, w_ref, b_ref,
                 y_out_ref, a2_out_ref, *, p, lambda_2, n_iter, eps):
    """One grid step == B_local graphs of the batch."""
    beta = beta_ref[0, 0]                         # learnable scalar, read from SMEM
    f    = y1_ref[...]                            # (Bl, N, D)  F (= Y1 input)
    y2   = y2_ref[...]                            # (Bl, N, D)
    z    = z_ref[...]                             # (Bl, N, D)
    lmat = l_ref[...]                             # (Bl, N, N)

    # --- A2 = cos_A2(Y2, beta): beta-scaled column-wise cosine similarity ---
    # TODO(synk): cos_A2 is not defined in the provided source; implemented as the
    # standard BiGCN feature graph (cosine similarity between feature columns of Y2).
    col_sq = jnp.sum(y2 * y2, axis=1, keepdims=True)          # (Bl, 1, D)
    y2n = y2 * jax.lax.rsqrt(col_sq + eps)                    # normalize columns first
    a2 = beta * jnp.einsum('bnd,bne->bde', y2n, y2n,
                           preferred_element_type=jnp.float32)  # (Bl, D, D)

    # --- ADMM_Y iterations (Type='mean'); L_2 = I - lambda_2*A2 folded into the update ---
    inv = 1.0 / (1.0 + p)
    y1c, y2c, zc = f, y2, z
    for _ in range(n_iter):                                   # static unroll (n_iter small)
        t = f + p * y2c + zc
        y1c = inv * jnp.einsum('bnm,bmd->bnd', lmat, t,
                               preferred_element_type=jnp.float32)
        t2 = f + p * y1c - zc
        y2c = inv * (t2 - lambda_2 * jnp.einsum('bnd,bde->bne', t2, a2,
                                                preferred_element_type=jnp.float32))
        zc = zc + p * (y2c - y1c)
    y = 0.5 * (y1c + y2c)                                     # (Bl, N, D)

    # --- stacked output projection: (Bl*N, D) @ (D, O) + bias ---
    bl, n, d = y.shape
    out = jnp.dot(y.reshape(bl * n, d), w_ref[...],
                  preferred_element_type=jnp.float32) + b_ref[...]
    y_out_ref[...] = out.reshape(bl, n, -1).astype(y_out_ref.dtype)
    a2_out_ref[...] = a2.astype(a2_out_ref.dtype)


def bigcn_layer(Y1, Y2, Z, L, weight1, bias1, beta, *, p, lambda_2, n_iter=2):
    """Batched BiGCN_layer forward. Accepts (B,N,D)/(B,N,N) or single-graph (N,D)/(N,N)."""
    single = (Y1.ndim == 2)
    if single:
        Y1, Y2, Z, L = Y1[None], Y2[None], Z[None], L[None]

    Y1 = Y1.astype(jnp.float32)
    Y2 = Y2.astype(jnp.float32)
    Z = Z.astype(jnp.float32)
    L = L.astype(jnp.float32)
    weight1 = weight1.astype(jnp.float32)
    bias1 = jnp.reshape(bias1, (1, -1)).astype(jnp.float32)
    beta_arr = jnp.reshape(jnp.asarray(beta, jnp.float32), (1, 1))

    B, N, D = Y1.shape
    O = weight1.shape[1]

    # 2 parallel steps when possible (feeds both v7x TCs); otherwise a single big step.
    num_steps = 2 if (B >= 2 and B % 2 == 0) else 1
    Bl = B // num_steps

    kern = functools.partial(bigcn_kernel, p=float(p), lambda_2=float(lambda_2),
                             n_iter=int(n_iter), eps=1e-8)

    # Advisory cost hint for the XLA scheduler.
    flops = B * (2 * N * D * D                                   # gram
                 + n_iter * (2 * N * N * D + 2 * N * D * D)      # ADMM matmuls
                 + 2 * N * D * O)                                # projection
    bytes_accessed = 4 * (4 * B * N * D + B * N * N + D * O + O
                          + B * N * O + B * D * D)
    cost = pl.CostEstimate(flops=flops, transcendentals=B * D,
                           bytes_accessed=bytes_accessed)

    fn = pl.pallas_call(
        kern,
        out_shape=(jax.ShapeDtypeStruct((B, N, O), jnp.float32),
                   jax.ShapeDtypeStruct((B, D, D), jnp.float32)),
        grid=(num_steps,),
        in_specs=[
            pl.BlockSpec(memory_space=pltpu.MemorySpace.SMEM),   # beta (1,1) scalar
            pl.BlockSpec((Bl, N, D), lambda s: (s, 0, 0)),       # Y1 (= F)
            pl.BlockSpec((Bl, N, D), lambda s: (s, 0, 0)),       # Y2
            pl.BlockSpec((Bl, N, D), lambda s: (s, 0, 0)),       # Z
            pl.BlockSpec((Bl, N, N), lambda s: (s, 0, 0)),       # L
            pl.BlockSpec((D, O), lambda s: (0, 0)),              # weight1 (shared)
            pl.BlockSpec((1, O), lambda s: (0, 0)),              # bias1  (shared)
        ],
        out_specs=(
            pl.BlockSpec((Bl, N, O), lambda s: (s, 0, 0)),       # Y
            pl.BlockSpec((Bl, D, D), lambda s: (s, 0, 0)),       # A2 (exact size)
        ),
        compiler_params=pltpu.CompilerParams(
            dimension_semantics=("parallel",)),                  # shard steps across TCs
        cost_estimate=cost,
    )
    Y_out, A2_out = fn(beta_arr, Y1, Y2, Z, L, weight1, bias1)

    if single:
        return Y_out[0], A2_out[0]
    return Y_out, A2_out


def bigcn_layer_ref(Y1, Y2, Z, L, weight1, bias1, beta, *, p, lambda_2, n_iter=2):
    """Pure-JAX single-graph reference mirroring the PyTorch forward semantics."""
    eps = 1e-8
    gram = Y2.T @ Y2
    col_sq = jnp.sum(Y2 * Y2, axis=0, keepdims=True)
    inv_n = jax.lax.rsqrt(col_sq + eps)
    A2 = beta * gram * inv_n * inv_n.T
    L2 = jnp.eye(A2.shape[0], dtype=jnp.float32) - lambda_2 * A2   # explicit L_2, as in PyTorch
    inv = 1.0 / (1.0 + p)
    F, y1c, y2c, zc = Y1, Y1, Y2, Z
    for _ in range(n_iter):
        y1c = inv * (L @ (F + p * y2c + zc))
        y2c = inv * ((F + p * y1c - zc) @ L2)
        zc = zc + p * (y2c - y1c)
    Y = 0.5 * (y1c + y2c)
    return Y @ weight1 + jnp.reshape(bias1, (1, -1)), A2


if __name__ == "__main__":
    # Hyperparameters of BiGCN_layer(ind, outd, p, lambda_1, lambda_2, ...)
    B, N, IND, OUTD = 4, 16, 32, 8
    p, lambda_1, lambda_2, n_iter = 0.5, 1.0, 0.1, 2   # lambda_1 unused in forward

    key = jax.random.PRNGKey(0)
    k1, k2, k3, k4, k5, k6, k7 = jax.random.split(key, 7)

    # Deterministic parameter init mirroring reset_parameters()
    stdv = 1.0 / math.sqrt(OUTD)
    weight1 = jax.random.uniform(k5, (IND, OUTD), jnp.float32, -stdv, stdv)
    bias1 = jax.random.uniform(k6, (1, OUTD), jnp.float32, -stdv, stdv)
    beta = jax.random.uniform(k7, (), jnp.float32, 0.0, 1.0)   # Parameter beta ~ U(0,1)

    # Batched inputs (B independent graphs)
    Y1 = jax.random.normal(k1, (B, N, IND), jnp.float32)
    Y2 = jax.random.normal(k2, (B, N, IND), jnp.float32)
    Z = jax.random.normal(k3, (B, N, IND), jnp.float32)
    L = jax.random.normal(k4, (B, N, N), jnp.float32) / math.sqrt(N)

    Y_out, A2_out = bigcn_layer(Y1, Y2, Z, L, weight1, bias1, beta,
                                p=p, lambda_2=lambda_2, n_iter=n_iter)
    jax.block_until_ready((Y_out, A2_out))

    ref_fn = jax.vmap(
        functools.partial(bigcn_layer_ref, p=p, lambda_2=lambda_2, n_iter=n_iter),
        in_axes=(0, 0, 0, 0, None, None, None))
    Y_ref, A2_ref = ref_fn(Y1, Y2, Z, L, weight1, bias1, beta)

    assert jnp.allclose(Y_out, Y_ref, atol=1e-4, rtol=1e-4)
    assert jnp.allclose(A2_out, A2_ref, atol=1e-4, rtol=1e-4)
    print("KERNEL_OK")
</pallas_src>

<mosaic_0001>
module attributes {stable_mosaic.version = 11 : i64} {
  func.func @bigcn_kernel(%arg0: i32, %arg1: memref<1x1xf32, #tpu.memory_space<smem>>, %arg2: memref<2x16x32xf32, #tpu.memory_space<vmem>>, %arg3: memref<2x16x32xf32, #tpu.memory_space<vmem>>, %arg4: memref<2x16x32xf32, #tpu.memory_space<vmem>>, %arg5: memref<2x16x16xf32, #tpu.memory_space<vmem>>, %arg6: memref<32x8xf32, #tpu.memory_space<vmem>>, %arg7: memref<1x8xf32, #tpu.memory_space<vmem>>, %arg8: memref<2x16x8xf32, #tpu.memory_space<vmem>>, %arg9: memref<2x32x32xf32, #tpu.memory_space<vmem>>) attributes {dimension_semantics = [#tpu.dimension_semantics<parallel>], iteration_bounds = array<i64: 2>, scalar_prefetch = 0 : i64, scratch_operands = 0 : i64, tpu.core_type = #tpu.core_type<tc>, window_params = [{transform_indices = @transform_0, window_bounds = array<i64: 1, 1>}, {transform_indices = @transform_1, window_bounds = array<i64: 2, 16, 32>}, {transform_indices = @transform_2, window_bounds = array<i64: 2, 16, 32>}, {transform_indices = @transform_3, window_bounds = array<i64: 2, 16, 32>}, {transform_indices = @transform_4, window_bounds = array<i64: 2, 16, 16>}, {pipeline_mode = #tpu.pipeline_mode<synchronous>, transform_indices = @transform_5, window_bounds = array<i64: 32, 8>}, {pipeline_mode = #tpu.pipeline_mode<synchronous>, transform_indices = @transform_6, window_bounds = array<i64: 1, 8>}, {transform_indices = @transform_7, window_bounds = array<i64: 2, 16, 8>}, {transform_indices = @transform_8, window_bounds = array<i64: 2, 32, 32>}]} {
    %c0 = arith.constant 0 : index
    %c0_0 = arith.constant 0 : index
    %0 = memref.load %arg1[%c0, %c0_0] : memref<1x1xf32, #tpu.memory_space<smem>>
    %c0_1 = arith.constant 0 : index
    %c0_2 = arith.constant 0 : index
    %c0_3 = arith.constant 0 : index
    %1 = vector.load %arg2[%c0_1, %c0_2, %c0_3] : memref<2x16x32xf32, #tpu.memory_space<vmem>>, vector<2x16x32xf32>
    %c0_4 = arith.constant 0 : index
    %c0_5 = arith.constant 0 : index
    %c0_6 = arith.constant 0 : index
    %2 = vector.load %arg3[%c0_4, %c0_5, %c0_6] : memref<2x16x32xf32, #tpu.memory_space<vmem>>, vector<2x16x32xf32>
    %c0_7 = arith.constant 0 : index
    %c0_8 = arith.constant 0 : index
    %c0_9 = arith.constant 0 : index
    %3 = vector.load %arg4[%c0_7, %c0_8, %c0_9] : memref<2x16x32xf32, #tpu.memory_space<vmem>>, vector<2x16x32xf32>
    %c0_10 = arith.constant 0 : index
    %c0_11 = arith.constant 0 : index
    %c0_12 = arith.constant 0 : index
    %4 = vector.load %arg5[%c0_10, %c0_11, %c0_12] : memref<2x16x16xf32, #tpu.memory_space<vmem>>, vector<2x16x16xf32>
    %5 = arith.mulf %2, %2 : vector<2x16x32xf32>
    %cst = arith.constant dense<0.000000e+00> : vector<2x32xf32>
    %6 = vector.multi_reduction <add>, %5, %cst [1] : vector<2x16x32xf32> to vector<2x32xf32>
    %7 = vector.shape_cast %6 : vector<2x32xf32> to vector<2x1x32xf32>
    %cst_13 = arith.constant 9.99999993E-9 : f32
    %8 = vector.broadcast %cst_13 : f32 to vector<2x1x32xf32>
    %9 = arith.addf %7, %8 : vector<2x1x32xf32>
    %10 = math.rsqrt %9 : vector<2x1x32xf32>
    %11 = vector.broadcast %10 : vector<2x1x32xf32> to vector<2x16x32xf32>
    %12 = arith.mulf %2, %11 : vector<2x16x32xf32>
    "tpu.trace_start"() <{level = 10 : i32, message = "bnd,bne->bde"}> : () -> ()
    %cst_14 = arith.constant dense<0.000000e+00> : vector<2x32x32xf32>
    %13 = tpu.matmul %12, %12, %cst_14 {dimension_numbers = #tpu.dot_dimension_numbers<[1], [1], [2], [2], [0, 0, 0, 2, 1, 2], [0], [0]>} : vector<2x16x32xf32>, vector<2x16x32xf32>, vector<2x32x32xf32> -> vector<2x32x32xf32>
    "tpu.trace_stop"() : () -> ()
    %14 = vector.broadcast %0 : f32 to vector<2x32x32xf32>
    %15 = arith.mulf %14, %13 : vector<2x32x32xf32>
    %cst_15 = arith.constant 5.000000e-01 : f32
    %16 = vector.broadcast %cst_15 : f32 to vector<2x16x32xf32>
    %17 = arith.mulf %16, %2 : vector<2x16x32xf32>
    %18 = arith.addf %1, %17 : vector<2x16x32xf32>
    %19 = arith.addf %18, %3 : vector<2x16x32xf32>
    "tpu.trace_start"() <{level = 10 : i32, message = "bnm,bmd->bnd"}> : () -> ()
    %cst_16 = arith.constant dense<0.000000e+00> : vector<2x16x32xf32>
    %20 = tpu.matmul %4, %19, %cst_16 {dimension_numbers = #tpu.dot_dimension_numbers<[2], [1], [1], [2], [0, 0, 0, 1, 1, 2], [0], [0]>} : vector<2x16x16xf32>, vector<2x16x32xf32>, vector<2x16x32xf32> -> vector<2x16x32xf32>
    "tpu.trace_stop"() : () -> ()
    %cst_17 = arith.constant 0.666666686 : f32
    %21 = vector.broadcast %cst_17 : f32 to vector<2x16x32xf32>
    %22 = arith.mulf %21, %20 : vector<2x16x32xf32>
    %cst_18 = arith.constant 5.000000e-01 : f32
    %23 = vector.broadcast %cst_18 : f32 to vector<2x16x32xf32>
    %24 = arith.mulf %23, %22 : vector<2x16x32xf32>
    %25 = arith.addf %1, %24 : vector<2x16x32xf32>
    %26 = arith.subf %25, %3 : vector<2x16x32xf32>
    "tpu.trace_start"() <{level = 10 : i32, message = "bnd,bde->bne"}> : () -> ()
    %cst_19 = arith.constant dense<0.000000e+00> : vector<2x16x32xf32>
    %27 = tpu.matmul %26, %15, %cst_19 {dimension_numbers = #tpu.dot_dimension_numbers<[2], [1], [1], [2], [0, 0, 0, 1, 1, 2], [0], [0]>} : vector<2x16x32xf32>, vector<2x32x32xf32>, vector<2x16x32xf32> -> vector<2x16x32xf32>
    "tpu.trace_stop"() : () -> ()
    %cst_20 = arith.constant 1.000000e-01 : f32
    %28 = vector.broadcast %cst_20 : f32 to vector<2x16x32xf32>
    %29 = arith.mulf %28, %27 : vector<2x16x32xf32>
    %30 = arith.subf %26, %29 : vector<2x16x32xf32>
    %cst_21 = arith.constant 0.666666686 : f32
    %31 = vector.broadcast %cst_21 : f32 to vector<2x16x32xf32>
    %32 = arith.mulf %31, %30 : vector<2x16x32xf32>
    %33 = arith.subf %32, %22 : vector<2x16x32xf32>
    %cst_22 = arith.constant 5.000000e-01 : f32
    %34 = vector.broadcast %cst_22 : f32 to vector<2x16x32xf32>
    %35 = arith.mulf %34, %33 : vector<2x16x32xf32>
    %36 = arith.addf %3, %35 : vector<2x16x32xf32>
    %cst_23 = arith.constant 5.000000e-01 : f32
    %37 = vector.broadcast %cst_23 : f32 to vector<2x16x32xf32>
    %38 = arith.mulf %37, %32 : vector<2x16x32xf32>
    %39 = arith.addf %1, %38 : vector<2x16x32xf32>
    %40 = arith.addf %39, %36 : vector<2x16x32xf32>
    "tpu.trace_start"() <{level = 10 : i32, message = "bnm,bmd->bnd"}> : () -> ()
    %cst_24 = arith.constant dense<0.000000e+00> : vector<2x16x32xf32>
    %41 = tpu.matmul %4, %40, %cst_24 {dimension_numbers = #tpu.dot_dimension_numbers<[2], [1], [1], [2], [0, 0, 0, 1, 1, 2], [0], [0]>} : vector<2x16x16xf32>, vector<2x16x32xf32>, vector<2x16x32xf32> -> vector<2x16x32xf32>
    "tpu.trace_stop"() : () -> ()
    %cst_25 = arith.constant 0.666666686 : f32
    %42 = vector.broadcast %cst_25 : f32 to vector<2x16x32xf32>
    %43 = arith.mulf %42, %41 : vector<2x16x32xf32>
    %cst_26 = arith.constant 5.000000e-01 : f32
    %44 = vector.broadcast %cst_26 : f32 to vector<2x16x32xf32>
    %45 = arith.mulf %44, %43 : vector<2x16x32xf32>
    %46 = arith.addf %1, %45 : vector<2x16x32xf32>
    %47 = arith.subf %46, %36 : vector<2x16x32xf32>
    "tpu.trace_start"() <{level = 10 : i32, message = "bnd,bde->bne"}> : () -> ()
    %cst_27 = arith.constant dense<0.000000e+00> : vector<2x16x32xf32>
    %48 = tpu.matmul %47, %15, %cst_27 {dimension_numbers = #tpu.dot_dimension_numbers<[2], [1], [1], [2], [0, 0, 0, 1, 1, 2], [0], [0]>} : vector<2x16x32xf32>, vector<2x32x32xf32>, vector<2x16x32xf32> -> vector<2x16x32xf32>
    "tpu.trace_stop"() : () -> ()
    %cst_28 = arith.constant 1.000000e-01 : f32
    %49 = vector.broadcast %cst_28 : f32 to vector<2x16x32xf32>
    %50 = arith.mulf %49, %48 : vector<2x16x32xf32>
    %51 = arith.subf %47, %50 : vector<2x16x32xf32>
    %cst_29 = arith.constant 0.666666686 : f32
    %52 = vector.broadcast %cst_29 : f32 to vector<2x16x32xf32>
    %53 = arith.mulf %52, %51 : vector<2x16x32xf32>
    %54 = arith.addf %43, %53 : vector<2x16x32xf32>
    %cst_30 = arith.constant 5.000000e-01 : f32
    %55 = vector.broadcast %cst_30 : f32 to vector<2x16x32xf32>
    %56 = arith.mulf %55, %54 : vector<2x16x32xf32>
    %57 = vector.shape_cast %56 : vector<2x16x32xf32> to vector<32x32xf32>
    %c0_31 = arith.constant 0 : index
    %c0_32 = arith.constant 0 : index
    %58 = vector.load %arg6[%c0_31, %c0_32] : memref<32x8xf32, #tpu.memory_space<vmem>>, vector<32x8xf32>
    %cst_33 = arith.constant dense<0.000000e+00> : vector<32x8xf32>
    %59 = tpu.matmul %57, %58, %cst_33 {dimension_numbers = #tpu.dot_dimension_numbers<[1], [0], [0], [1], [0, 0, 1, 1], [], []>} : vector<32x32xf32>, vector<32x8xf32>, vector<32x8xf32> -> vector<32x8xf32>
    %c0_34 = arith.constant 0 : index
    %c0_35 = arith.constant 0 : index
    %60 = vector.load %arg7[%c0_34, %c0_35] : memref<1x8xf32, #tpu.memory_space<vmem>>, vector<1x8xf32>
    %61 = vector.broadcast %60 : vector<1x8xf32> to vector<32x8xf32>
    %62 = arith.addf %59, %61 : vector<32x8xf32>
    %63 = vector.shape_cast %62 : vector<32x8xf32> to vector<2x16x8xf32>
    %c0_36 = arith.constant 0 : index
    %c0_37 = arith.constant 0 : index
    %c0_38 = arith.constant 0 : index
    %64 = vector.load %arg8[%c0_36, %c0_37, %c0_38] : memref<2x16x8xf32, #tpu.memory_space<vmem>>, vector<2x16x8xf32>
    tpu.vector_store %arg8[%c0_36, %c0_37, %c0_38], %63 {strides = array<i32>} : memref<2x16x8xf32, #tpu.memory_space<vmem>>, vector<2x16x8xf32>,
    %c0_39 = arith.constant 0 : index
    %c0_40 = arith.constant 0 : index
    %c0_41 = arith.constant 0 : index
    %65 = vector.load %arg9[%c0_39, %c0_40, %c0_41] : memref<2x32x32xf32, #tpu.memory_space<vmem>>, vector<2x32x32xf32>
    tpu.vector_store %arg9[%c0_39, %c0_40, %c0_41], %15 {strides = array<i32>} : memref<2x32x32xf32, #tpu.memory_space<vmem>>, vector<2x32x32xf32>,
    return
  }
  func.func @transform_0(%arg0: i32) -> (i32, i32) {
    %c0_i32 = arith.constant 0 : i32
    %c0_i32_0 = arith.constant 0 : i32
    %c0_i32_1 = arith.constant 0 : i32
    return %c0_i32, %c0_i32_0 : i32, i32
  }
  func.func @transform_1(%arg0: i32) -> (i32, i32, i32) {
    %c0_i32 = arith.constant 0 : i32
    %c0_i32_0 = arith.constant 0 : i32
    %c0_i32_1 = arith.constant 0 : i32
    return %arg0, %c0_i32, %c0_i32_0 : i32, i32, i32
  }
  func.func @transform_2(%arg0: i32) -> (i32, i32, i32) {
    %c0_i32 = arith.constant 0 : i32
    %c0_i32_0 = arith.constant 0 : i32
    %c0_i32_1 = arith.constant 0 : i32
    return %arg0, %c0_i32, %c0_i32_0 : i32, i32, i32
  }
  func.func @transform_3(%arg0: i32) -> (i32, i32, i32) {
    %c0_i32 = arith.constant 0 : i32
    %c0_i32_0 = arith.constant 0 : i32
    %c0_i32_1 = arith.constant 0 : i32
    return %arg0, %c0_i32, %c0_i32_0 : i32, i32, i32
  }
  func.func @transform_4(%arg0: i32) -> (i32, i32, i32) {
    %c0_i32 = arith.constant 0 : i32
    %c0_i32_0 = arith.constant 0 : i32
    %c0_i32_1 = arith.constant 0 : i32
    return %arg0, %c0_i32, %c0_i32_0 : i32, i32, i32
  }
  func.func @transform_5(%arg0: i32) -> (i32, i32) {
    %c0_i32 = arith.constant 0 : i32
    %c0_i32_0 = arith.constant 0 : i32
    %c0_i32_1 = arith.constant 0 : i32
    return %c0_i32, %c0_i32_0 : i32, i32
  }
  func.func @transform_6(%arg0: i32) -> (i32, i32) {
    %c0_i32 = arith.constant 0 : i32
    %c0_i32_0 = arith.constant 0 : i32
    %c0_i32_1 = arith.constant 0 : i32
    return %c0_i32, %c0_i32_0 : i32, i32
  }
  func.func @transform_7(%arg0: i32) -> (i32, i32, i32) {
    %c0_i32 = arith.constant 0 : i32
    %c0_i32_0 = arith.constant 0 : i32
    %c0_i32_1 = arith.constant 0 : i32
    return %arg0, %c0_i32, %c0_i32_0 : i32, i32, i32
  }
  func.func @transform_8(%arg0: i32) -> (i32, i32, i32) {
    %c0_i32 = arith.constant 0 : i32
    %c0_i32_0 = arith.constant 0 : i32
    %c0_i32_1 = arith.constant 0 : i32
    return %arg0, %c0_i32, %c0_i32_0 : i32, i32, i32
  }
}

</mosaic_0001>

<llo_original>
// kernel: tpu_custom_call.1
$region0: #{tpu_custom_call.1}
  #allocation0 [shape = 'u32[]', space=smem, size = 0x4, offset = 0x4, fixed_abs, tag = 'smem constant byte address 0x4 - core index']
  #allocation1 [shape = 'u32[72,128]{1,0:T(1,128)}', space=vmem, size = 0x9000, scoped, tag = 'internal scratch']
  #allocation2 [shape = 'f32[1,1]{1,0:T(1,128)S(6)}', space=smem, size = 0x200, scoped, tag = 'scoped memory for tpu_custom_call.1']
  %s0 = inlined_call_operand.<no memory space> [shape: f32[1,1], index: 0, kind: input, shape index: {}]
  %s1 = inlined_call_operand.hbm [shape: f32[4,16,32], index: 1, kind: input, shape index: {}]
  %s2 = inlined_call_operand.hbm [shape: f32[4,16,32], index: 2, kind: input, shape index: {}]
  %s3 = inlined_call_operand.hbm [shape: f32[4,16,32], index: 3, kind: input, shape index: {}]
  %s4 = inlined_call_operand.hbm [shape: f32[4,16,16], index: 4, kind: input, shape index: {}]
  %s5 = inlined_call_operand.vmem [shape: f32[32,8], index: 5, kind: input, shape index: {}]
  %s6 = inlined_call_operand.vmem [shape: f32[1,8], index: 6, kind: input, shape index: {}]
  %s7 = inlined_call_operand.vmem [shape: f32[4,16,8], index: 7, kind: output, shape index: {0}]
  %s8 = inlined_call_operand.hbm [shape: f32[4,32,32], index: 8, kind: output, shape index: {1}]
  %9 = xla_tuple %s7, %s8
  %s10 = sld [smem:[#allocation0]]
  $region85: #{tpu_custom_call.1} parent=0
    _
  %s12 = ssub.s32 1, %s10
  %s13 = scalar_select 0, %s12, %s10
  %14 = sst [smem:[#allocation2]] %s0
  $region1: #{tpu_custom_call.1} parent=0
    #allocation3 [shape = 'u8[32768]{0}', space=vmem, size = 0x8000, scoped, tag = 'input window, operand 1']
    #allocation4 [shape = 's32[2]{0}', space=sflag, size = 0x8, scoped, tag = 'scoped memory for tpu_custom_call.1']
    #allocation5 [shape = 's32[2]{0}', space=sflag, size = 0x8, scoped, tag = 'scoped memory for tpu_custom_call.1']
    #allocation6 [shape = 'u8[32768]{0}', space=vmem, size = 0x8000, scoped, tag = 'input window, operand 2']
    #allocation7 [shape = 's32[2]{0}', space=sflag, size = 0x8, scoped, tag = 'scoped memory for tpu_custom_call.1']
    #allocation8 [shape = 'u8[32768]{0}', space=vmem, size = 0x8000, scoped, tag = 'input window, operand 3']
    #allocation9 [shape = 'u8[32768]{0}', space=vmem, size = 0x8000, scoped, tag = 'input window, operand 4']
    #allocation10 [shape = 's32[2]{0}', space=sflag, size = 0x8, scoped, tag = 'scoped memory for tpu_custom_call.1']
    #allocation11 [shape = 'u8[65536]{0}', space=vmem, size = 0x10000, scoped, tag = 'output window, operand 1']
    %15 = vsyncpa [#allocation4], 0
    %s16 = scalar_lea.sflag [#allocation4], 1
    %17 = vsyncpa %s16, 0
    %18 = vsyncpa [#allocation7], 0
    %s19 = scalar_lea.sflag [#allocation7], 1
    %20 = vsyncpa %s19, 0
    %21 = vsyncpa [#allocation10], 0
    %s22 = scalar_lea.sflag [#allocation10], 1
    %23 = vsyncpa %s22, 0
    %24 = vsyncpa [#allocation5], 0
    %s25 = scalar_lea.sflag [#allocation5], 1
    %26 = vsyncpa %s25, 0
    loop: start=0, step=1, limit=4
    $region2: #{tpu_custom_call.1} parent=1 // loop_pre_header
      _
    $region3: #{tpu_custom_call.1} parent=1 // loop_header
      %s28 = sphi 0, %s32
      %p29 = scmp.ge.s32.totalorder %s28, 4
      %s36 = sphi 0, %s36
      %s38 = sphi 0, %s36
      %s39 = sphi 0, %s38
      %s53 = sphi 0, %s39
      %s59 = sphi 0, %s61
      %s62 = sphi 0, %s59
      %s63 = sphi 0, %s62
      %s79 = sphi 0, %s63
      %s85 = sphi 0, %s87
      %s88 = sphi 0, %s85
      %s89 = sphi 0, %s88
      %s105 = sphi 0, %s89
      %s111 = sphi 0, %s113
      %s114 = sphi 0, %s111
      %s115 = sphi 0, %s114
      %s131 = sphi 0, %s115
      %s137 = sphi 0, %s139
      %s140 = sphi 0, %s137
      %s141 = sphi 0, %s140
      %s157 = sphi 0, %s141
      %s161 = sphi 0, %s161
      %s163 = sphi 0, %s161
      %s164 = sphi 0, %s163
      %s178 = sphi 0, %s164
      %s182 = sphi 0, %s182
      %s184 = sphi 0, %s182
      %s185 = sphi 0, %s184
      %s199 = sphi 0, %s185
      %s205 = sphi 0, %s207
      %s208 = sphi 0, %s205
      %s209 = sphi 0, %s208
      %s225 = sphi 0, %s209
      %s231 = sphi 0, %s233
      %s234 = sphi 0, %s231
      %s235 = sphi 0, %s234
      %s251 = sphi 0, %s235
    $region4: #{tpu_custom_call.1} parent=1 // loop_header_branch
      %31 = sbr.rel (%p29) target = $region8
    $region5: #{tpu_custom_call.1} parent=1 // loop_body
      %s33 = ssub.s32 %s28, 1
      %s34 = ssub.s32 %s28, 2
      %s35 = sadd.s32 %s28, 1
      %s37 = sadd.s32 %s36, 1
      %p40 = scmp.eq.s32.totalorder %s28, 1
      %p41 = scmp.ne.s32.totalorder %s36, %s38
      %p42 = scmp.eq.s32.totalorder %s28, 0
      %p43 = por %p41, %p42
      %p44 = scmp.ne.s32.totalorder %s36, %s38
      %p45 = scmp.eq.s32.totalorder %s33, 1
      %p46 = por %p44, %p45
      %p47 = scmp.ne.s32.totalorder %s38, %s39
      %p48 = scmp.eq.s32.totalorder %s33, 0
      %p49 = por %p47, %p48
      %p50 = scmp.ne.s32.totalorder %s38, %s39
      %p51 = scmp.eq.s32.totalorder %s34, 1
      %p52 = por %p50, %p51
      %p54 = scmp.ne.s32.totalorder %s39, %s53
      %p55 = scmp.eq.s32.totalorder %s34, 0
      %p56 = por %p54, %p55
      %s57 = ssub.s32 %s28, %s35
      %p58 = scmp.eq.s32.totalorder %s57, 0
      %s60 = sadd.s32 %s59, 1
      %s61 = scalar_select %p58, %s59, %s60
      %p64 = pneg %p58
      %p65 = scmp.eq.s32.totalorder %s28, 1
      %p66 = por %p64, %p65
      %p67 = scmp.ne.s32.totalorder %s59, %s62
      %p68 = scmp.eq.s32.totalorder %s28, 0
      %p69 = por %p67, %p68
      %p70 = scmp.ne.s32.totalorder %s59, %s62
      %p71 = scmp.eq.s32.totalorder %s33, 1
      %p72 = por %p70, %p71
      %p73 = scmp.ne.s32.totalorder %s62, %s63
      %p74 = scmp.eq.s32.totalorder %s33, 0
      %p75 = por %p73, %p74
      %p76 = scmp.ne.s32.totalorder %s62, %s63
      %p77 = scmp.eq.s32.totalorder %s34, 1
      %p78 = por %p76, %p77
      %p80 = scmp.ne.s32.totalorder %s63, %s79
      %p81 = scmp.eq.s32.totalorder %s34, 0
      %p82 = por %p80, %p81
      %s83 = ssub.s32 %s28, %s35
      %p84 = scmp.eq.s32.totalorder %s83, 0
      %s86 = sadd.s32 %s85, 1
      %s87 = scalar_select %p84, %s85, %s86
      %p90 = pneg %p84
      %p91 = scmp.eq.s32.totalorder %s28, 1
      %p92 = por %p90, %p91
      %p93 = scmp.ne.s32.totalorder %s85, %s88
      %p94 = scmp.eq.s32.totalorder %s28, 0
      %p95 = por %p93, %p94
      %p96 = scmp.ne.s32.totalorder %s85, %s88
      %p97 = scmp.eq.s32.totalorder %s33, 1
      %p98 = por %p96, %p97
      %p99 = scmp.ne.s32.totalorder %s88, %s89
      %p100 = scmp.eq.s32.totalorder %s33, 0
      %p101 = por %p99, %p100
      %p102 = scmp.ne.s32.totalorder %s88, %s89
      %p103 = scmp.eq.s32.totalorder %s34, 1
      %p104 = por %p102, %p103
      %p106 = scmp.ne.s32.totalorder %s89, %s105
      %p107 = scmp.eq.s32.totalorder %s34, 0
      %p108 = por %p106, %p107
      %s109 = ssub.s32 %s28, %s35
      %p110 = scmp.eq.s32.totalorder %s109, 0
      %s112 = sadd.s32 %s111, 1
      %s113 = scalar_select %p110, %s111, %s112
      %p116 = pneg %p110
      %p117 = scmp.eq.s32.totalorder %s28, 1
      %p118 = por %p116, %p117
      %p119 = scmp.ne.s32.totalorder %s111, %s114
      %p120 = scmp.eq.s32.totalorder %s28, 0
      %p121 = por %p119, %p120
      %p122 = scmp.ne.s32.totalorder %s111, %s114
      %p123 = scmp.eq.s32.totalorder %s33, 1
      %p124 = por %p122, %p123
      %p125 = scmp.ne.s32.totalorder %s114, %s115
      %p126 = scmp.eq.s32.totalorder %s33, 0
      %p127 = por %p125, %p126
      %p128 = scmp.ne.s32.totalorder %s114, %s115
      %p129 = scmp.eq.s32.totalorder %s34, 1
      %p130 = por %p128, %p129
      %p132 = scmp.ne.s32.totalorder %s115, %s131
      %p133 = scmp.eq.s32.totalorder %s34, 0
      %p134 = por %p132, %p133
      %s135 = ssub.s32 %s28, %s35
      %p136 = scmp.eq.s32.totalorder %s135, 0
      %s138 = sadd.s32 %s137, 1
      %s139 = scalar_select %p136, %s137, %s138
      %p142 = pneg %p136
      %p143 = scmp.eq.s32.totalorder %s28, 1
      %p144 = por %p142, %p143
      %p145 = scmp.ne.s32.totalorder %s137, %s140
      %p146 = scmp.eq.s32.totalorder %s28, 0
      %p147 = por %p145, %p146
      %p148 = scmp.ne.s32.totalorder %s137, %s140
      %p149 = scmp.eq.s32.totalorder %s33, 1
      %p150 = por %p148, %p149
      %p151 = scmp.ne.s32.totalorder %s140, %s141
      %p152 = scmp.eq.s32.totalorder %s33, 0
      %p153 = por %p151, %p152
      %p154 = scmp.ne.s32.totalorder %s140, %s141
      %p155 = scmp.eq.s32.totalorder %s34, 1
      %p156 = por %p154, %p155
      %p158 = scmp.ne.s32.totalorder %s141, %s157
      %p159 = scmp.eq.s32.totalorder %s34, 0
      %p160 = por %p158, %p159
      %s162 = sadd.s32 %s161, 1
      %p165 = scmp.eq.s32.totalorder %s28, 1
      %p166 = scmp.ne.s32.totalorder %s161, %s163
      %p167 = scmp.eq.s32.totalorder %s28, 0
      %p168 = por %p166, %p167
      %p169 = scmp.ne.s32.totalorder %s161, %s163
      %p170 = scmp.eq.s32.totalorder %s33, 1
      %p171 = por %p169, %p170
      %p172 = scmp.ne.s32.totalorder %s163, %s164
      %p173 = scmp.eq.s32.totalorder %s33, 0
      %p174 = por %p172, %p173
      %p175 = scmp.ne.s32.totalorder %s163, %s164
      %p176 = scmp.eq.s32.totalorder %s34, 1
      %p177 = por %p175, %p176
      %p179 = scmp.ne.s32.totalorder %s164, %s178
      %p180 = scmp.eq.s32.totalorder %s34, 0
      %p181 = por %p179, %p180
      %s183 = sadd.s32 %s182, 1
      %p186 = scmp.eq.s32.totalorder %s28, 1
      %p187 = scmp.ne.s32.totalorder %s182, %s184
      %p188 = scmp.eq.s32.totalorder %s28, 0
      %p189 = por %p187, %p188
      %p190 = scmp.ne.s32.totalorder %s182, %s184
      %p191 = scmp.eq.s32.totalorder %s33, 1
      %p192 = por %p190, %p191
      %p193 = scmp.ne.s32.totalorder %s184, %s185
      %p194 = scmp.eq.s32.totalorder %s33, 0
      %p195 = por %p193, %p194
      %p196 = scmp.ne.s32.totalorder %s184, %s185
      %p197 = scmp.eq.s32.totalorder %s34, 1
      %p198 = por %p196, %p197
      %p200 = scmp.ne.s32.totalorder %s185, %s199
      %p201 = scmp.eq.s32.totalorder %s34, 0
      %p202 = por %p200, %p201
      %s203 = ssub.s32 %s28, %s35
      %p204 = scmp.eq.s32.totalorder %s203, 0
      %s206 = sadd.s32 %s205, 1
      %s207 = scalar_select %p204, %s205, %s206
      %p210 = pneg %p204
      %p211 = scmp.eq.s32.totalorder %s28, 1
      %p212 = por %p210, %p211
      %p213 = scmp.ne.s32.totalorder %s205, %s208
      %p214 = scmp.eq.s32.totalorder %s28, 0
      %p215 = por %p213, %p214
      %p216 = scmp.ne.s32.totalorder %s205, %s208
      %p217 = scmp.eq.s32.totalorder %s33, 1
      %p218 = por %p216, %p217
      %p219 = scmp.ne.s32.totalorder %s208, %s209
      %p220 = scmp.eq.s32.totalorder %s33, 0
      %p221 = por %p219, %p220
      %p222 = scmp.ne.s32.totalorder %s208, %s209
      %p223 = scmp.eq.s32.totalorder %s34, 1
      %p224 = por %p222, %p223
      %p226 = scmp.ne.s32.totalorder %s209, %s225
      %p227 = scmp.eq.s32.totalorder %s34, 0
      %p228 = por %p226, %p227
      %s229 = ssub.s32 %s28, %s35
      %p230 = scmp.eq.s32.totalorder %s229, 0
      %s232 = sadd.s32 %s231, 1
      %s233 = scalar_select %p230, %s231, %s232
      %p236 = pneg %p230
      %p237 = scmp.eq.s32.totalorder %s28, 1
      %p238 = por %p236, %p237
      %p239 = scmp.ne.s32.totalorder %s231, %s234
      %p240 = scmp.eq.s32.totalorder %s28, 0
      %p241 = por %p239, %p240
      %p242 = scmp.ne.s32.totalorder %s231, %s234
      %p243 = scmp.eq.s32.totalorder %s33, 1
      %p244 = por %p242, %p243
      %p245 = scmp.ne.s32.totalorder %s234, %s235
      %p246 = scmp.eq.s32.totalorder %s33, 0
      %p247 = por %p245, %p246
      %p248 = scmp.ne.s32.totalorder %s234, %s235
      %p249 = scmp.eq.s32.totalorder %s34, 1
      %p250 = por %p248, %p249
      %p252 = scmp.ne.s32.totalorder %s235, %s251
      %p253 = scmp.eq.s32.totalorder %s34, 0
      %p254 = por %p252, %p253
      %p255 = scmp.le.s32.totalorder 1, %s28
      %p256 = scmp.lt.s32.totalorder %s28, 3
      %p257 = pnand %p255, %p256
      %p258 = pneg %p257
      // Predicated region
      $region9: #{tpu_custom_call.1} parent=5 // pred_check
        _
      $region10: #{tpu_custom_call.1} parent=5 // pred_check_branch
        %260 = sbr.rel (%p257) target = $region12
      $region11: #{tpu_custom_call.1} parent=5 // pred_region
        %s261 = ssub.s32 %s28, 1
        // Predicated region
        $region13: #{tpu_custom_call.1} parent=11 // pred_check
          %p262 = pneg %p49
        $region14: #{tpu_custom_call.1} parent=11 // pred_check_branch
          %264 = sbr.rel (%p262) target = $region16
        $region15: #{tpu_custom_call.1} parent=11 // pred_region
          _
        $region16: #{tpu_custom_call.1} parent=11 // pred_fallthru
          _
        // Predicated region
        $region17: #{tpu_custom_call.1} parent=11 // pred_check
          %p265 = pneg %p174
        $region18: #{tpu_custom_call.1} parent=11 // pred_check_branch
          %267 = sbr.rel (%p265) target = $region20
        $region19: #{tpu_custom_call.1} parent=11 // pred_region
          _
        $region20: #{tpu_custom_call.1} parent=11 // pred_fallthru
          _
        // Predicated region
        $region21: #{tpu_custom_call.1} parent=11 // pred_check
          %p268 = pneg %p195
        $region22: #{tpu_custom_call.1} parent=11 // pred_check_branch
          %270 = sbr.rel (%p268) target = $region24
        $region23: #{tpu_custom_call.1} parent=11 // pred_region
          _
        $region24: #{tpu_custom_call.1} parent=11 // pred_fallthru
          _
      $region12: #{tpu_custom_call.1} parent=5 // pred_fallthru
        _
      %p271 = scmp.lt.s32.totalorder %s28, 2
      // Predicated region
      $region25: #{tpu_custom_call.1} parent=5 // pred_check
        %p272 = pneg %p271
      $region26: #{tpu_custom_call.1} parent=5 // pred_check_branch
        %274 = sbr.rel (%p272) target = $region28
      $region27: #{tpu_custom_call.1} parent=5 // pred_region
        // Predicated region
        $region29: #{tpu_custom_call.1} parent=27 // pred_check
          %p275 = pneg %p69
        $region30: #{tpu_custom_call.1} parent=27 // pred_check_branch
          %277 = sbr.rel (%p275) target = $region32
        $region31: #{tpu_custom_call.1} parent=27 // pred_region
          %s278 = sand.u32 %s59, 1
          %s279 = scalar_lea.sflag [#allocation4], %s278
          %s280 = sand.u32 %s59, 1
          %s281 = smul.addr %s280, 32
          %s282 = scalar_lea.vmem [#allocation3], %s281
          %s283 = smul.u32 2, %s28
          %285 = vsyncadd %s279, 0
          %s286 = smul.addr %s283, 2
          %s287 = smul.addr %s286, 8
          %s288 = scalar_lea.hbm %s1, %s287
          %s289 = sshll.u32 %s288, 4
          %s290 = int_to_ptr.hbm [resolvable:$true] %s289
          %s291 = sshll.u32 %s282, 4
          %s292 = int_to_ptr.vmem [resolvable:$true] %s291
          %297 = dma.hbm_to_vmem [thread:$0]  %s290, 512, %s292, %s279, 128, 128, 8
        $region32: #{tpu_custom_call.1} parent=27 // pred_fallthru
          _
        // Predicated region
        $region33: #{tpu_custom_call.1} parent=27 // pred_check
          %p298 = pneg %p95
        $region34: #{tpu_custom_call.1} parent=27 // pred_check_branch
          %300 = sbr.rel (%p298) target = $region36
        $region35: #{tpu_custom_call.1} parent=27 // pred_region
          %s301 = sand.u32 %s28, 1
          %s302 = scalar_lea.sflag [#allocation7], %s301
          %s303 = sand.u32 %s85, 1
          %s304 = smul.addr %s303, 32
          %s305 = scalar_lea.vmem [#allocation6], %s304
          %s306 = smul.u32 2, %s28
          %308 = vsyncadd %s302, 0
          %s309 = smul.addr %s306, 2
          %s310 = smul.addr %s309, 8
          %s311 = scalar_lea.hbm %s2, %s310
          %s312 = sshll.u32 %s311, 4
          %s313 = int_to_ptr.hbm [resolvable:$true] %s312
          %s314 = sshll.u32 %s305, 4
          %s315 = int_to_ptr.vmem [resolvable:$true] %s314
          %320 = dma.hbm_to_vmem [thread:$0]  %s313, 512, %s315, %s302, 128, 128, 8
        $region36: #{tpu_custom_call.1} parent=27 // pred_fallthru
          _
        // Predicated region
        $region37: #{tpu_custom_call.1} parent=27 // pred_check
          %p321 = pneg %p121
        $region38: #{tpu_custom_call.1} parent=27 // pred_check_branch
          %323 = sbr.rel (%p321) target = $region40
        $region39: #{tpu_custom_call.1} parent=27 // pred_region
          %s324 = sand.u32 %s28, 1
          %s325 = scalar_lea.sflag [#allocation7], %s324
          %s326 = sand.u32 %s111, 1
          %s327 = smul.addr %s326, 32
          %s328 = scalar_lea.vmem [#allocation8], %s327
          %s329 = smul.u32 2, %s28
          %331 = vsyncadd %s325, 0
          %s332 = smul.addr %s329, 2
          %s333 = smul.addr %s332, 8
          %s334 = scalar_lea.hbm %s3, %s333
          %s335 = sshll.u32 %s334, 4
          %s336 = int_to_ptr.hbm [resolvable:$true] %s335
          %s337 = sshll.u32 %s328, 4
          %s338 = int_to_ptr.vmem [resolvable:$true] %s337
          %343 = dma.hbm_to_vmem [thread:$0]  %s336, 512, %s338, %s325, 128, 128, 8
        $region40: #{tpu_custom_call.1} parent=27 // pred_fallthru
          _
        // Predicated region
        $region41: #{tpu_custom_call.1} parent=27 // pred_check
          %p344 = pneg %p147
        $region42: #{tpu_custom_call.1} parent=27 // pred_check_branch
          %346 = sbr.rel (%p344) target = $region44
        $region43: #{tpu_custom_call.1} parent=27 // pred_region
          %s347 = sand.u32 %s137, 1
          %s348 = scalar_lea.sflag [#allocation10], %s347
          %s349 = sand.u32 %s137, 1
          %s350 = smul.addr %s349, 32
          %s351 = scalar_lea.vmem [#allocation9], %s350
          %s352 = smul.u32 2, %s28
          %354 = vsyncadd %s348, 0
          %s355 = smul.addr %s352, 2
          %s356 = smul.addr %s355, 8
          %s357 = scalar_lea.hbm %s4, %s356
          %s358 = sshll.u32 %s357, 4
          %s359 = int_to_ptr.hbm [resolvable:$true] %s358
          %s360 = sshll.u32 %s351, 4
          %s361 = int_to_ptr.vmem [resolvable:$true] %s360
          %366 = dma.hbm_to_vmem [thread:$0]  %s359, 512, %s361, %s348, 128, 128, 8
        $region44: #{tpu_custom_call.1} parent=27 // pred_fallthru
          _
      $region28: #{tpu_custom_call.1} parent=5 // pred_fallthru
        _
      %p367 = scmp.le.s32.totalorder 1, %s28
      %p368 = scmp.lt.s32.totalorder %s28, 3
      %p369 = pnand %p367, %p368
      %p370 = pneg %p369
      // Predicated region
      $region45: #{tpu_custom_call.1} parent=5 // pred_check
        _
      $region46: #{tpu_custom_call.1} parent=5 // pred_check_branch
        %372 = sbr.rel (%p369) target = $region48
      $region47: #{tpu_custom_call.1} parent=5 // pred_region
        %s373 = ssub.s32 %s28, 1
        %s374 = sand.u32 %s62, 1
        %s375 = scalar_lea.sflag [#allocation4], %s374
        %s376 = sand.u32 %s62, 1
        %s377 = smul.addr %s376, 32
        %s378 = scalar_lea.vmem [#allocation3], %s377
        // Predicated region
        $region49: #{tpu_custom_call.1} parent=47 // pred_check
          %p379 = pneg %p75
        $region50: #{tpu_custom_call.1} parent=47 // pred_check_branch
          %381 = sbr.rel (%p379) target = $region52
        $region51: #{tpu_custom_call.1} parent=47 // pred_region
          %383 = dma.done %s375, 512
        $region52: #{tpu_custom_call.1} parent=47 // pred_fallthru
          _
        %s384 = sand.u32 %s33, 1
        %s385 = scalar_lea.sflag [#allocation7], %s384
        %s386 = sand.u32 %s88, 1
        %s387 = smul.addr %s386, 32
        %s388 = scalar_lea.vmem [#allocation6], %s387
        // Predicated region
        $region53: #{tpu_custom_call.1} parent=47 // pred_check
          %p389 = pneg %p101
        $region54: #{tpu_custom_call.1} parent=47 // pred_check_branch
          %391 = sbr.rel (%p389) target = $region56
        $region55: #{tpu_custom_call.1} parent=47 // pred_region
          %393 = dma.done %s385, 512
        $region56: #{tpu_custom_call.1} parent=47 // pred_fallthru
          _
        %s394 = sand.u32 %s33, 1
        %s395 = scalar_lea.sflag [#allocation7], %s394
        %s396 = sand.u32 %s114, 1
        %s397 = smul.addr %s396, 32
        %s398 = scalar_lea.vmem [#allocation8], %s397
        // Predicated region
        $region57: #{tpu_custom_call.1} parent=47 // pred_check
          %p399 = pneg %p127
        $region58: #{tpu_custom_call.1} parent=47 // pred_check_branch
          %401 = sbr.rel (%p399) target = $region60
        $region59: #{tpu_custom_call.1} parent=47 // pred_region
          %403 = dma.done %s395, 512
        $region60: #{tpu_custom_call.1} parent=47 // pred_fallthru
          _
        %s404 = sand.u32 %s140, 1
        %s405 = scalar_lea.sflag [#allocation10], %s404
        %s406 = sand.u32 %s140, 1
        %s407 = smul.addr %s406, 32
        %s408 = scalar_lea.vmem [#allocation9], %s407
        // Predicated region
        $region61: #{tpu_custom_call.1} parent=47 // pred_check
          %p409 = pneg %p153
        $region62: #{tpu_custom_call.1} parent=47 // pred_check_branch
          %411 = sbr.rel (%p409) target = $region64
        $region63: #{tpu_custom_call.1} parent=47 // pred_region
          %413 = dma.done %s405, 512
        $region64: #{tpu_custom_call.1} parent=47 // pred_fallthru
          _
        %p414 = pneg %p49
        %p415 = pneg %p46
        %s416 = sand.u32 %s62, 1
        %s417 = scalar_lea.sflag [#allocation4], %s416
        %s418 = sand.u32 %s62, 1
        %s419 = smul.addr %s418, 32
        %s420 = scalar_lea.vmem [#allocation3], %s419
        %p421 = pneg %p75
        %p422 = pneg %p72
        %s423 = sand.u32 %s33, 1
        %s424 = scalar_lea.sflag [#allocation7], %s423
        %s425 = sand.u32 %s88, 1
        %s426 = smul.addr %s425, 32
        %s427 = scalar_lea.vmem [#allocation6], %s426
        %p428 = pneg %p101
        %p429 = pneg %p98
        %s430 = sand.u32 %s33, 1
        %s431 = scalar_lea.sflag [#allocation7], %s430
        %s432 = sand.u32 %s114, 1
        %s433 = smul.addr %s432, 32
        %s434 = scalar_lea.vmem [#allocation8], %s433
        %p435 = pneg %p127
        %p436 = pneg %p124
        %s437 = sand.u32 %s140, 1
        %s438 = scalar_lea.sflag [#allocation10], %s437
        %s439 = sand.u32 %s140, 1
        %s440 = smul.addr %s439, 32
        %s441 = scalar_lea.vmem [#allocation9], %s440
        %p442 = pneg %p153
        %p443 = pneg %p150
        %p444 = pneg %p174
        %p445 = pneg %p171
        %p446 = pneg %p195
        %p447 = pneg %p192
        %p448 = pneg %p221
        %p449 = pneg %p218
        %s450 = smul.u32 2, %s33
        %p451 = scmp.lt.s32.totalorder %s450, 3
        %s452 = scalar_select %p451, %s450, 3
        %s453 = smul.addr %s452, 2
        %s454 = smul.addr %s453, 8
        %s455 = scalar_lea.vmem %s7, %s454
        %p456 = pneg %p247
        %p457 = pneg %p244
        %s458 = sand.u32 %s234, 1
        %s459 = scalar_lea.sflag [#allocation5], %s458
        %s460 = sand.u32 %s234, 1
        %s461 = smul.addr %s460, 64
        %s462 = scalar_lea.vmem [#allocation11], %s461
        %s463 = smul.u32 2, %s33
        %s464 = smul.u32 2, %s33
        %s465 = smul.u32 2, %s33
        %s466 = smul.u32 2, %s33
        %s467 = smul.u32 2, %s33
        %p468 = scmp.lt.s32.totalorder %s467, 3
        %s469 = scalar_select %p468, %s467, 3
        %s470 = smul.addr %s469, 2
        %s471 = smul.addr %s470, 8
        %s472 = scalar_lea.vmem %s7, %s471
        %s473 = smul.u32 2, %s33
        %s474 = smul.u32 2, %s33
        %s475 = sld [smem:[#allocation2]]
        %v476 = vld [vmem:[%s378] sm:$0xff]
        %v477 = vld [vmem:[%s378 + $0x8] sm:$0xff]
        %v478 = vld [vmem:[%s378 + $0x10] sm:$0xff]
        %v479 = vld [vmem:[%s378 + $0x18] sm:$0xff]
        %v480 = vld [vmem:[%s388] sm:$0xff]
        %v481 = vld [vmem:[%s388 + $0x8] sm:$0xff]
        %v482 = vld [vmem:[%s388 + $0x10] sm:$0xff]
        %v483 = vld [vmem:[%s388 + $0x18] sm:$0xff]
        %v484 = vld [vmem:[%s398] sm:$0xff]
        %v485 = vld [vmem:[%s398 + $0x8] sm:$0xff]
        %v486 = vld [vmem:[%s398 + $0x10] sm:$0xff]
        %v487 = vld [vmem:[%s398 + $0x18] sm:$0xff]
        %v488 = vld [vmem:[%s408] sm:$0xff]
        %v489 = vld [vmem:[%s408 + $0x8] sm:$0xff]
        %v490 = vld [vmem:[%s408 + $0x10] sm:$0xff]
        %v491 = vld [vmem:[%s408 + $0x18] sm:$0xff]
        %v492 = vmul.f32 %v480, %v480
        %v493 = vmul.f32 %v481, %v481
        %v494 = vmul.f32 %v482, %v482
        %v495 = vmul.f32 %v483, %v483
        %vm496 = vcmask 261120
        %v497 = vsel %vm496, %v492, 0.0
        %v498 = vsel %vm496, %v493, 0.0
        %v499 = vadd.f32 %v497, %v498
        %v500 = vrot.slane %v499, 4
        %v501 = vadd.f32 %v499, %v500
        %v502 = vrot.slane %v501, 2
        %v503 = vadd.f32 %v501, %v502
        %v504 = vrot.slane %v503, 1
        %v505 = vadd.f32 %v503, %v504
        %v506 = vsel %vm496, %v494, 0.0
        %v507 = vsel %vm496, %v495, 0.0
        %v508 = vadd.f32 %v506, %v507
        %v509 = vrot.slane %v508, 4
        %v510 = vadd.f32 %v508, %v509
        %v511 = vrot.slane %v510, 2
        %v512 = vadd.f32 %v510, %v511
        %v513 = vrot.slane %v512, 1
        %v514 = vadd.f32 %v512, %v513
        %v515 = vadd.f32 %v505, 1e-08
        %v516 = vadd.f32 %v514, 1e-08
        %v517 = vrsqrt.pop %v515
        %v518 = vmul.f32 %v517, %v515
        %v519 = vmul.f32 %v518, %v517
        %v520 = vmul.f32 0.5, %v519
        %v521 = vsub.f32 1.5, %v520
        %v522 = vmul.f32 %v517, %v521
        %vm523 = vweird.f32 %v515
        %vm524 = vweird.f32 %v517
        %vm525 = vmor %vm523, %vm524
        %v526 = vsel %vm525, %v517, %v522
        %v527 = vrsqrt.pop %v516
        %v528 = vmul.f32 %v527, %v516
        %v529 = vmul.f32 %v528, %v527
        %v530 = vmul.f32 0.5, %v529
        %v531 = vsub.f32 1.5, %v530
        %v532 = vmul.f32 %v527, %v531
        %vm533 = vweird.f32 %v516
        %vm534 = vweird.f32 %v527
        %vm535 = vmor %vm533, %vm534
        %v536 = vsel %vm535, %v527, %v532
        %v537 = vmul.f32 %v480, %v526
        %v538 = vmul.f32 %v481, %v526
        %v539 = vmul.f32 %v482, %v536
        %v540 = vmul.f32 %v483, %v536
        %541 = vxpose.xlu0.b32.start [1/16] %v537, 128
        %542 = vxpose.xlu0.b32.cont [2/16] %v538, 128
        %543 = vxpose.xlu0.b32.cont [3/16] 0.0, 128
        %544 = vxpose.xlu0.b32.cont [4/16] 0.0, 128
        %545 = vxpose.xlu0.b32.cont [5/16] 0.0, 128
        %546 = vxpose.xlu0.b32.cont [6/16] 0.0, 128
        %547 = vxpose.xlu0.b32.cont [7/16] 0.0, 128
        %548 = vxpose.xlu0.b32.cont [8/16] 0.0, 128
        %549 = vxpose.xlu0.b32.cont [9/16] 0.0, 128
        %550 = vxpose.xlu0.b32.cont [10/16] 0.0, 128
        %551 = vxpose.xlu0.b32.cont [11/16] 0.0, 128
        %552 = vxpose.xlu0.b32.cont [12/16] 0.0, 128
        %553 = vxpose.xlu0.b32.cont [13/16] 0.0, 128
        %554 = vxpose.xlu0.b32.cont [14/16] 0.0, 128
        %555 = vxpose.xlu0.b32.cont [15/16] 0.0, 128
        %556 = vxpose.xlu0.b32.end [16/16] 0.0, 128
        %v557 = vpop.trf.xlu0
        %v558 = vpop.trf.xlu0
        %v559 = vpop.trf.xlu0
        %v560 = vpop.trf.xlu0
        %v561 = vpop.trf.xlu0
        %v562 = vpop.trf.xlu0
        %v563 = vpop.trf.xlu0
        %v564 = vpop.trf.xlu0
        %v565 = vpop.trf.xlu0
        %v566 = vpop.trf.xlu0
        %v567 = vpop.trf.xlu0
        %v568 = vpop.trf.xlu0
        %v569 = vpop.trf.xlu0
        %v570 = vpop.trf.xlu0
        %v571 = vpop.trf.xlu0
        %v572 = vpop.trf.xlu0
        %vm573 = vcmask 130048
        %v575 = vsel %vm573, %v557, 0
        %v578 = vsel %vm573, %v558, 0
        %v581 = vsel %vm573, %v559, 0
        %v584 = vsel %vm573, %v560, 0
        %586 = vmatpush.msra.mxu0 0.0
        %587 = vmatpush.msra.mxu0 0.0
        %588 = vmatpush.msra.mxu0 0.0
        %589 = vmatpush.msra.mxu0 0.0
        %590 = vmatpush.msra.mxu0 0.0
        %591 = vmatpush.msra.mxu0 0.0
        %592 = vmatpush.msra.mxu0 0.0
        %593 = vmatpush.msra.mxu0 0.0
        %594 = vmatpush.msra.mxu0 0.0
        %595 = vmatpush.msra.mxu0 0.0
        %596 = vmatpush.msra.mxu0 0.0
        %597 = vmatpush.msra.mxu0 0.0
        %598 = vmatpush.msra.mxu0 0.0
        %599 = vmatpush.msra.mxu0 0.0
        %600 = vmatpush.msra.mxu0 %v538
        %601 = vmatpush.msra.mxu0 %v537
        %602 = vmatmul.f32.gmra.mxu0 %v575
        %v603 = vpop.f32.mrf.mxu0
        %v604 = vadd.f32 0.0, %v603
        %605 = vmatmul.f32.gmra.mxu0 %v578
        %v606 = vpop.f32.mrf.mxu0
        %v607 = vadd.f32 0.0, %v606
        %608 = vmatmul.f32.gmra.mxu0 %v581
        %v609 = vpop.f32.mrf.mxu0
        %v610 = vadd.f32 0.0, %v609
        %611 = vmatmul.f32.gmra.mxu0 %v584
        %v612 = vpop.f32.mrf.mxu0
        %v613 = vadd.f32 0.0, %v612
        %614 = vdwg.mxu0
        %615 = vxpose.xlu0.b32.start [1/16] %v539, 128
        %616 = vxpose.xlu0.b32.cont [2/16] %v540, 128
        %617 = vxpose.xlu0.b32.cont [3/16] 0.0, 128
        %618 = vxpose.xlu0.b32.cont [4/16] 0.0, 128
        %619 = vxpose.xlu0.b32.cont [5/16] 0.0, 128
        %620 = vxpose.xlu0.b32.cont [6/16] 0.0, 128
        %621 = vxpose.xlu0.b32.cont [7/16] 0.0, 128
        %622 = vxpose.xlu0.b32.cont [8/16] 0.0, 128
        %623 = vxpose.xlu0.b32.cont [9/16] 0.0, 128
        %624 = vxpose.xlu0.b32.cont [10/16] 0.0, 128
        %625 = vxpose.xlu0.b32.cont [11/16] 0.0, 128
        %626 = vxpose.xlu0.b32.cont [12/16] 0.0, 128
        %627 = vxpose.xlu0.b32.cont [13/16] 0.0, 128
        %628 = vxpose.xlu0.b32.cont [14/16] 0.0, 128
        %629 = vxpose.xlu0.b32.cont [15/16] 0.0, 128
        %630 = vxpose.xlu0.b32.end [16/16] 0.0, 128
        %v631 = vpop.trf.xlu0
        %v632 = vpop.trf.xlu0
        %v633 = vpop.trf.xlu0
        %v634 = vpop.trf.xlu0
        %v635 = vpop.trf.xlu0
        %v636 = vpop.trf.xlu0
        %v637 = vpop.trf.xlu0
        %v638 = vpop.trf.xlu0
        %v639 = vpop.trf.xlu0
        %v640 = vpop.trf.xlu0
        %v641 = vpop.trf.xlu0
        %v642 = vpop.trf.xlu0
        %v643 = vpop.trf.xlu0
        %v644 = vpop.trf.xlu0
        %v645 = vpop.trf.xlu0
        %v646 = vpop.trf.xlu0
        %v648 = vsel %vm573, %v631, 0
        %v651 = vsel %vm573, %v632, 0
        %v654 = vsel %vm573, %v633, 0
        %v657 = vsel %vm573, %v634, 0
        %659 = vmatpush.msra.mxu0 0.0
        %660 = vmatpush.msra.mxu0 0.0
        %661 = vmatpush.msra.mxu0 0.0
        %662 = vmatpush.msra.mxu0 0.0
        %663 = vmatpush.msra.mxu0 0.0
        %664 = vmatpush.msra.mxu0 0.0
        %665 = vmatpush.msra.mxu0 0.0
        %666 = vmatpush.msra.mxu0 0.0
        %667 = vmatpush.msra.mxu0 0.0
        %668 = vmatpush.msra.mxu0 0.0
        %669 = vmatpush.msra.mxu0 0.0
        %670 = vmatpush.msra.mxu0 0.0
        %671 = vmatpush.msra.mxu0 0.0
        %672 = vmatpush.msra.mxu0 0.0
        %673 = vmatpush.msra.mxu0 %v540
        %674 = vmatpush.msra.mxu0 %v539
        %675 = vmatmul.f32.gmra.mxu0 %v648
        %v676 = vpop.f32.mrf.mxu0
        %v677 = vadd.f32 0.0, %v676
        %678 = vmatmul.f32.gmra.mxu0 %v651
        %v679 = vpop.f32.mrf.mxu0
        %v680 = vadd.f32 0.0, %v679
        %681 = vmatmul.f32.gmra.mxu0 %v654
        %v682 = vpop.f32.mrf.mxu0
        %v683 = vadd.f32 0.0, %v682
        %684 = vmatmul.f32.gmra.mxu0 %v657
        %v685 = vpop.f32.mrf.mxu0
        %v686 = vadd.f32 0.0, %v685
        %687 = vdwg.mxu0
        %v688 = vstv %s475
        %v689 = vmul.f32 %v688, %v604
        %v690 = vmul.f32 %v688, %v607
        %v691 = vmul.f32 %v688, %v610
        %v692 = vmul.f32 %v688, %v613
        %v693 = vmul.f32 %v688, %v677
        %v694 = vmul.f32 %v688, %v680
        %v695 = vmul.f32 %v688, %v683
        %v696 = vmul.f32 %v688, %v686
        %v697 = vmul.f32 %v480, 0.5
        %v698 = vmul.f32 %v481, 0.5
        %v699 = vmul.f32 %v482, 0.5
        %v700 = vmul.f32 %v483, 0.5
        %v701 = vadd.f32 %v476, %v697
        %v702 = vadd.f32 %v477, %v698
        %v703 = vadd.f32 %v478, %v699
        %v704 = vadd.f32 %v479, %v700
        %v705 = vadd.f32 %v701, %v484
        %v706 = vadd.f32 %v702, %v485
        %v707 = vadd.f32 %v703, %v486
        %v708 = vadd.f32 %v704, %v487
        %v710 = vsel %vm573, %v488, 0
        %v713 = vsel %vm573, %v489, 0
        %715 = vmatpush.msra.mxu0 0.0
        %716 = vmatpush.msra.mxu0 0.0
        %717 = vmatpush.msra.mxu0 0.0
        %718 = vmatpush.msra.mxu0 0.0
        %719 = vmatpush.msra.mxu0 0.0
        %720 = vmatpush.msra.mxu0 0.0
        %721 = vmatpush.msra.mxu0 0.0
        %722 = vmatpush.msra.mxu0 0.0
        %723 = vmatpush.msra.mxu0 0.0
        %724 = vmatpush.msra.mxu0 0.0
        %725 = vmatpush.msra.mxu0 0.0
        %726 = vmatpush.msra.mxu0 0.0
        %727 = vmatpush.msra.mxu0 0.0
        %728 = vmatpush.msra.mxu0 0.0
        %729 = vmatpush.msra.mxu0 %v706
        %730 = vmatpush.msra.mxu0 %v705
        %731 = vmatmul.f32.gmra.mxu0 %v710
        %v732 = vpop.f32.mrf.mxu0
        %v733 = vadd.f32 0.0, %v732
        %734 = vmatmul.f32.gmra.mxu0 %v713
        %v735 = vpop.f32.mrf.mxu0
        %v736 = vadd.f32 0.0, %v735
        %737 = vdwg.mxu0
        %v739 = vsel %vm573, %v490, 0
        %v742 = vsel %vm573, %v491, 0
        %744 = vmatpush.msra.mxu0 0.0
        %745 = vmatpush.msra.mxu0 0.0
        %746 = vmatpush.msra.mxu0 0.0
        %747 = vmatpush.msra.mxu0 0.0
        %748 = vmatpush.msra.mxu0 0.0
        %749 = vmatpush.msra.mxu0 0.0
        %750 = vmatpush.msra.mxu0 0.0
        %751 = vmatpush.msra.mxu0 0.0
        %752 = vmatpush.msra.mxu0 0.0
        %753 = vmatpush.msra.mxu0 0.0
        %754 = vmatpush.msra.mxu0 0.0
        %755 = vmatpush.msra.mxu0 0.0
        %756 = vmatpush.msra.mxu0 0.0
        %757 = vmatpush.msra.mxu0 0.0
        %758 = vmatpush.msra.mxu0 %v708
        %759 = vmatpush.msra.mxu0 %v707
        %760 = vmatmul.f32.gmra.mxu0 %v739
        %v761 = vpop.f32.mrf.mxu0
        %v762 = vadd.f32 0.0, %v761
        %763 = vmatmul.f32.gmra.mxu0 %v742
        %v764 = vpop.f32.mrf.mxu0
        %v765 = vadd.f32 0.0, %v764
        %766 = vdwg.mxu0
        %v767 = vmul.f32 %v733, 0.6666667
        %v768 = vmul.f32 %v736, 0.6666667
        %v769 = vmul.f32 %v762, 0.6666667
        %v770 = vmul.f32 %v765, 0.6666667
        %v771 = vmul.f32 %v767, 0.5
        %v772 = vmul.f32 %v768, 0.5
        %v773 = vmul.f32 %v769, 0.5
        %v774 = vmul.f32 %v770, 0.5
        %v775 = vadd.f32 %v476, %v771
        %v776 = vadd.f32 %v477, %v772
        %v777 = vadd.f32 %v478, %v773
        %v778 = vadd.f32 %v479, %v774
        %v779 = vsub.f32 %v775, %v484
        %v780 = vsub.f32 %v776, %v485
        %v781 = vsub.f32 %v777, %v486
        %v782 = vsub.f32 %v778, %v487
        %v784 = vsel %vm496, %v779, 0
        %v787 = vsel %vm496, %v780, 0
        %789 = vmatpush.msra.mxu0 0.0
        %790 = vmatpush.msra.mxu0 0.0
        %791 = vmatpush.msra.mxu0 0.0
        %792 = vmatpush.msra.mxu0 0.0
        %793 = vmatpush.msra.mxu0 0.0
        %794 = vmatpush.msra.mxu0 0.0
        %795 = vmatpush.msra.mxu0 0.0
        %796 = vmatpush.msra.mxu0 0.0
        %797 = vmatpush.msra.mxu0 0.0
        %798 = vmatpush.msra.mxu0 0.0
        %799 = vmatpush.msra.mxu0 0.0
        %800 = vmatpush.msra.mxu0 0.0
        %801 = vmatpush.msra.mxu0 %v692
        %802 = vmatpush.msra.mxu0 %v691
        %803 = vmatpush.msra.mxu0 %v690
        %804 = vmatpush.msra.mxu0 %v689
        %805 = vmatmul.f32.gmra.mxu0 %v784
        %v806 = vpop.f32.mrf.mxu0
        %v807 = vadd.f32 0.0, %v806
        %808 = vmatmul.f32.gmra.mxu0 %v787
        %v809 = vpop.f32.mrf.mxu0
        %v810 = vadd.f32 0.0, %v809
        %811 = vdwg.mxu0
        %v813 = vsel %vm496, %v781, 0
        %v816 = vsel %vm496, %v782, 0
        %818 = vmatpush.msra.mxu0 0.0
        %819 = vmatpush.msra.mxu0 0.0
        %820 = vmatpush.msra.mxu0 0.0
        %821 = vmatpush.msra.mxu0 0.0
        %822 = vmatpush.msra.mxu0 0.0
        %823 = vmatpush.msra.mxu0 0.0
        %824 = vmatpush.msra.mxu0 0.0
        %825 = vmatpush.msra.mxu0 0.0
        %826 = vmatpush.msra.mxu0 0.0
        %827 = vmatpush.msra.mxu0 0.0
        %828 = vmatpush.msra.mxu0 0.0
        %829 = vmatpush.msra.mxu0 0.0
        %830 = vmatpush.msra.mxu0 %v696
        %831 = vmatpush.msra.mxu0 %v695
        %832 = vmatpush.msra.mxu0 %v694
        %833 = vmatpush.msra.mxu0 %v693
        %834 = vmatmul.f32.gmra.mxu0 %v813
        %v835 = vpop.f32.mrf.mxu0
        %v836 = vadd.f32 0.0, %v835
        %837 = vmatmul.f32.gmra.mxu0 %v816
        %v838 = vpop.f32.mrf.mxu0
        %v839 = vadd.f32 0.0, %v838
        %840 = vdwg.mxu0
        %v841 = vmul.f32 %v807, 0.1
        %v842 = vmul.f32 %v810, 0.1
        %v843 = vmul.f32 %v836, 0.1
        %v844 = vmul.f32 %v839, 0.1
        %v845 = vsub.f32 %v779, %v841
        %v846 = vsub.f32 %v780, %v842
        %v847 = vsub.f32 %v781, %v843
        %v848 = vsub.f32 %v782, %v844
        %v849 = vmul.f32 %v845, 0.6666667
        %v850 = vmul.f32 %v846, 0.6666667
        %v851 = vmul.f32 %v847, 0.6666667
        %v852 = vmul.f32 %v848, 0.6666667
        %v853 = vsub.f32 %v849, %v767
        %v854 = vsub.f32 %v850, %v768
        %v855 = vsub.f32 %v851, %v769
        %v856 = vsub.f32 %v852, %v770
        %v857 = vmul.f32 %v853, 0.5
        %v858 = vmul.f32 %v854, 0.5
        %v859 = vmul.f32 %v855, 0.5
        %v860 = vmul.f32 %v856, 0.5
        %v861 = vadd.f32 %v484, %v857
        %v862 = vadd.f32 %v485, %v858
        %v863 = vadd.f32 %v486, %v859
        %v864 = vadd.f32 %v487, %v860
        %v865 = vmul.f32 %v849, 0.5
        %v866 = vmul.f32 %v850, 0.5
        %v867 = vmul.f32 %v851, 0.5
        %v868 = vmul.f32 %v852, 0.5
        %v869 = vadd.f32 %v476, %v865
        %v870 = vadd.f32 %v477, %v866
        %v871 = vadd.f32 %v478, %v867
        %v872 = vadd.f32 %v479, %v868
        %v873 = vadd.f32 %v869, %v861
        %v874 = vadd.f32 %v870, %v862
        %v875 = vadd.f32 %v871, %v863
        %v876 = vadd.f32 %v872, %v864
        %877 = vmatpush.msra.mxu0 0.0
        %878 = vmatpush.msra.mxu0 0.0
        %879 = vmatpush.msra.mxu0 0.0
        %880 = vmatpush.msra.mxu0 0.0
        %881 = vmatpush.msra.mxu0 0.0
        %882 = vmatpush.msra.mxu0 0.0
        %883 = vmatpush.msra.mxu0 0.0
        %884 = vmatpush.msra.mxu0 0.0
        %885 = vmatpush.msra.mxu0 0.0
        %886 = vmatpush.msra.mxu0 0.0
        %887 = vmatpush.msra.mxu0 0.0
        %888 = vmatpush.msra.mxu0 0.0
        %889 = vmatpush.msra.mxu0 0.0
        %890 = vmatpush.msra.mxu0 0.0
        %891 = vmatpush.msra.mxu0 %v874
        %892 = vmatpush.msra.mxu0 %v873
        %893 = vmatmul.f32.gmra.mxu0 %v710
        %v894 = vpop.f32.mrf.mxu0
        %v895 = vadd.f32 0.0, %v894
        %896 = vmatmul.f32.gmra.mxu0 %v713
        %v897 = vpop.f32.mrf.mxu0
        %v898 = vadd.f32 0.0, %v897
        %899 = vdwg.mxu0
        %900 = vmatpush.msra.mxu0 0.0
        %901 = vmatpush.msra.mxu0 0.0
        %902 = vmatpush.msra.mxu0 0.0
        %903 = vmatpush.msra.mxu0 0.0
        %904 = vmatpush.msra.mxu0 0.0
        %905 = vmatpush.msra.mxu0 0.0
        %906 = vmatpush.msra.mxu0 0.0
        %907 = vmatpush.msra.mxu0 0.0
        %908 = vmatpush.msra.mxu0 0.0
        %909 = vmatpush.msra.mxu0 0.0
        %910 = vmatpush.msra.mxu0 0.0
        %911 = vmatpush.msra.mxu0 0.0
        %912 = vmatpush.msra.mxu0 0.0
        %913 = vmatpush.msra.mxu0 0.0
        %914 = vmatpush.msra.mxu0 %v876
        %915 = vmatpush.msra.mxu0 %v875
        %916 = vmatmul.f32.gmra.mxu0 %v739
        %v917 = vpop.f32.mrf.mxu0
        %v918 = vadd.f32 0.0, %v917
        %919 = vmatmul.f32.gmra.mxu0 %v742
        %v920 = vpop.f32.mrf.mxu0
        %v921 = vadd.f32 0.0, %v920
        %922 = vdwg.mxu0
        %v923 = vmul.f32 %v895, 0.6666667
        %v924 = vmul.f32 %v898, 0.6666667
        %v925 = vmul.f32 %v918, 0.6666667
        %v926 = vmul.f32 %v921, 0.6666667
        %v927 = vmul.f32 %v923, 0.5
        %v928 = vmul.f32 %v924, 0.5
        %v929 = vmul.f32 %v925, 0.5
        %v930 = vmul.f32 %v926, 0.5
        %v931 = vadd.f32 %v476, %v927
        %v932 = vadd.f32 %v477, %v928
        %v933 = vadd.f32 %v478, %v929
        %v934 = vadd.f32 %v479, %v930
        %v935 = vsub.f32 %v931, %v861
        %v936 = vsub.f32 %v932, %v862
        %v937 = vsub.f32 %v933, %v863
        %v938 = vsub.f32 %v934, %v864
        %v940 = vsel %vm496, %v935, 0
        %v943 = vsel %vm496, %v936, 0
        %945 = vmatpush.msra.mxu0 0.0
        %946 = vmatpush.msra.mxu0 0.0
        %947 = vmatpush.msra.mxu0 0.0
        %948 = vmatpush.msra.mxu0 0.0
        %949 = vmatpush.msra.mxu0 0.0
        %950 = vmatpush.msra.mxu0 0.0
        %951 = vmatpush.msra.mxu0 0.0
        %952 = vmatpush.msra.mxu0 0.0
        %953 = vmatpush.msra.mxu0 0.0
        %954 = vmatpush.msra.mxu0 0.0
        %955 = vmatpush.msra.mxu0 0.0
        %956 = vmatpush.msra.mxu0 0.0
        %957 = vmatpush.msra.mxu0 %v692
        %958 = vmatpush.msra.mxu0 %v691
        %959 = vmatpush.msra.mxu0 %v690
        %960 = vmatpush.msra.mxu0 %v689
        %961 = vmatmul.f32.gmra.mxu0 %v940
        %v962 = vpop.f32.mrf.mxu0
        %v963 = vadd.f32 0.0, %v962
        %964 = vmatmul.f32.gmra.mxu0 %v943
        %v965 = vpop.f32.mrf.mxu0
        %v966 = vadd.f32 0.0, %v965
        %967 = vdwg.mxu0
        %v969 = vsel %vm496, %v937, 0
        %v972 = vsel %vm496, %v938, 0
        %974 = vmatpush.msra.mxu0 0.0
        %975 = vmatpush.msra.mxu0 0.0
        %976 = vmatpush.msra.mxu0 0.0
        %977 = vmatpush.msra.mxu0 0.0
        %978 = vmatpush.msra.mxu0 0.0
        %979 = vmatpush.msra.mxu0 0.0
        %980 = vmatpush.msra.mxu0 0.0
        %981 = vmatpush.msra.mxu0 0.0
        %982 = vmatpush.msra.mxu0 0.0
        %983 = vmatpush.msra.mxu0 0.0
        %984 = vmatpush.msra.mxu0 0.0
        %985 = vmatpush.msra.mxu0 0.0
        %986 = vmatpush.msra.mxu0 %v696
        %987 = vmatpush.msra.mxu0 %v695
        %988 = vmatpush.msra.mxu0 %v694
        %989 = vmatpush.msra.mxu0 %v693
        %990 = vmatmul.f32.gmra.mxu0 %v969
        %v991 = vpop.f32.mrf.mxu0
        %v992 = vadd.f32 0.0, %v991
        %993 = vmatmul.f32.gmra.mxu0 %v972
        %v994 = vpop.f32.mrf.mxu0
        %v995 = vadd.f32 0.0, %v994
        %996 = vdwg.mxu0
        %v997 = vmul.f32 %v963, 0.1
        %v998 = vmul.f32 %v966, 0.1
        %v999 = vmul.f32 %v992, 0.1
        %v1000 = vmul.f32 %v995, 0.1
        %v1001 = vsub.f32 %v935, %v997
        %v1002 = vsub.f32 %v936, %v998
        %v1003 = vsub.f32 %v937, %v999
        %v1004 = vsub.f32 %v938, %v1000
        %v1005 = vmul.f32 %v1001, 0.6666667
        %v1006 = vmul.f32 %v1002, 0.6666667
        %v1007 = vmul.f32 %v1003, 0.6666667
        %v1008 = vmul.f32 %v1004, 0.6666667
        %v1009 = vadd.f32 %v923, %v1005
        %v1010 = vadd.f32 %v924, %v1006
        %v1011 = vadd.f32 %v925, %v1007
        %v1012 = vadd.f32 %v926, %v1008
        %v1013 = vmul.f32 %v1009, 0.5
        %v1014 = vmul.f32 %v1010, 0.5
        %v1015 = vmul.f32 %v1011, 0.5
        %v1016 = vmul.f32 %v1012, 0.5
        %v1017 = vld [vmem:[%s5] sm:$0xff]
        %v1018 = vld [vmem:[%s5 + $0x8] sm:$0xff]
        %v1019 = vld [vmem:[%s5 + $0x10] sm:$0xff]
        %v1020 = vld [vmem:[%s5 + $0x18] sm:$0xff]
        %v1021 = vld [vmem:[%s6] sm:$0x1]
        %v1023 = vperm.slane %v1021, 0
        %v1026 = vsel %vm496, %v1013, 0
        %v1029 = vsel %vm496, %v1014, 0
        %v1032 = vsel %vm496, %v1015, 0
        %v1035 = vsel %vm496, %v1016, 0
        %1037 = vmatpush.msra.mxu0 0.0
        %1038 = vmatpush.msra.mxu0 0.0
        %1039 = vmatpush.msra.mxu0 0.0
        %1040 = vmatpush.msra.mxu0 0.0
        %1041 = vmatpush.msra.mxu0 0.0
        %1042 = vmatpush.msra.mxu0 0.0
        %1043 = vmatpush.msra.mxu0 0.0
        %1044 = vmatpush.msra.mxu0 0.0
        %1045 = vmatpush.msra.mxu0 0.0
        %1046 = vmatpush.msra.mxu0 0.0
        %1047 = vmatpush.msra.mxu0 0.0
        %1048 = vmatpush.msra.mxu0 0.0
        %1049 = vmatpush.msra.mxu0 %v1020
        %1050 = vmatpush.msra.mxu0 %v1019
        %1051 = vmatpush.msra.mxu0 %v1018
        %1052 = vmatpush.msra.mxu0 %v1017
        %1053 = vmatmul.f32.gmra.mxu0 %v1026
        %v1054 = vpop.f32.mrf.mxu0
        %v1055 = vadd.f32 %v1023, %v1054
        %1056 = vmatmul.f32.gmra.mxu0 %v1029
        %v1057 = vpop.f32.mrf.mxu0
        %v1058 = vadd.f32 %v1023, %v1057
        %1059 = vmatmul.f32.gmra.mxu0 %v1032
        %v1060 = vpop.f32.mrf.mxu0
        %v1061 = vadd.f32 %v1023, %v1060
        %1062 = vmatmul.f32.gmra.mxu0 %v1035
        %v1063 = vpop.f32.mrf.mxu0
        %v1064 = vadd.f32 %v1023, %v1063
        %1065 = vdwg.mxu0
        %vm1066 = vcmask 64512
        %1067 = vst.msk [vmem:[%s472] sm:$0xff] %vm1066, %v1055
        %1068 = vst.msk [vmem:[%s472 + $0x8] sm:$0xff] %vm1066, %v1058
        %1069 = vst.msk [vmem:[%s472 + $0x10] sm:$0xff] %vm1066, %v1061
        %1070 = vst.msk [vmem:[%s472 + $0x18] sm:$0xff] %vm1066, %v1064
        %1071 = vst.msk [vmem:[%s462] sm:$0xff] %vm496, %v689
        %1072 = vst.msk [vmem:[%s462 + $0x8] sm:$0xff] %vm496, %v690
        %1073 = vst.msk [vmem:[%s462 + $0x10] sm:$0xff] %vm496, %v691
        %1074 = vst.msk [vmem:[%s462 + $0x18] sm:$0xff] %vm496, %v692
        %1075 = vst.msk [vmem:[%s462 + $0x20] sm:$0xff] %vm496, %v693
        %1076 = vst.msk [vmem:[%s462 + $0x28] sm:$0xff] %vm496, %v694
        %1077 = vst.msk [vmem:[%s462 + $0x30] sm:$0xff] %vm496, %v695
        %1078 = vst.msk [vmem:[%s462 + $0x38] sm:$0xff] %vm496, %v696
        %s1079 = smul.u32 2, %s33
        %p1080 = scmp.lt.s32.totalorder %s1079, 3
        %s1081 = scalar_select %p1080, %s1079, 3
        %s1082 = smul.addr %s1081, 2
        %s1083 = smul.addr %s1082, 8
        %s1084 = scalar_lea.vmem %s7, %s1083
        %s1085 = sand.u32 %s234, 1
        %s1086 = scalar_lea.sflag [#allocation5], %s1085
        %s1087 = sand.u32 %s234, 1
        %s1088 = smul.addr %s1087, 64
        %s1089 = scalar_lea.vmem [#allocation11], %s1088
        // Predicated region
        $region65: #{tpu_custom_call.1} parent=47 // pred_check
          %p1090 = pneg %p218
        $region66: #{tpu_custom_call.1} parent=47 // pred_check_branch
          %1092 = sbr.rel (%p1090) target = $region68
        $region67: #{tpu_custom_call.1} parent=47 // pred_region
          %s1093 = smul.u32 2, %s33
        $region68: #{tpu_custom_call.1} parent=47 // pred_fallthru
          _
        // Predicated region
        $region69: #{tpu_custom_call.1} parent=47 // pred_check
          %p1094 = pneg %p244
        $region70: #{tpu_custom_call.1} parent=47 // pred_check_branch
          %1096 = sbr.rel (%p1094) target = $region72
        $region71: #{tpu_custom_call.1} parent=47 // pred_region
          %s1097 = smul.u32 2, %s33
          %1099 = vsyncadd %s1086, 0
          %s1100 = smul.addr %s1097, 4
          %s1101 = smul.addr %s1100, 8
          %s1102 = scalar_lea.hbm %s8, %s1101
          %s1103 = sshll.u32 %s1089, 4
          %s1104 = int_to_ptr.vmem [resolvable:$true] %s1103
          %s1105 = sshll.u32 %s1102, 4
          %s1106 = int_to_ptr.hbm [resolvable:$true] %s1105
          %1111 = dma.vmem_to_hbm [thread:$0]  %s1104, 1024, %s1106, %s1086, 128, 128, 8
        $region72: #{tpu_custom_call.1} parent=47 // pred_fallthru
          _
      $region48: #{tpu_custom_call.1} parent=5 // pred_fallthru
        _
      %p1112 = scmp.le.s32.totalorder 2, %s28
      // Predicated region
      $region73: #{tpu_custom_call.1} parent=5 // pred_check
        %p1113 = pneg %p1112
      $region74: #{tpu_custom_call.1} parent=5 // pred_check_branch
        %1115 = sbr.rel (%p1113) target = $region76
      $region75: #{tpu_custom_call.1} parent=5 // pred_region
        %s1116 = ssub.s32 %s28, 2
        // Predicated region
        $region77: #{tpu_custom_call.1} parent=75 // pred_check
          %p1117 = pneg %p224
        $region78: #{tpu_custom_call.1} parent=75 // pred_check_branch
          %1119 = sbr.rel (%p1117) target = $region80
        $region79: #{tpu_custom_call.1} parent=75 // pred_region
          %s1120 = smul.u32 2, %s34
          %p1121 = scmp.lt.s32.totalorder %s1120, 3
          %s1122 = scalar_select %p1121, %s1120, 3
          %s1123 = smul.addr %s1122, 2
          %s1124 = smul.addr %s1123, 8
          %s1125 = scalar_lea.vmem %s7, %s1124
        $region80: #{tpu_custom_call.1} parent=75 // pred_fallthru
          _
        // Predicated region
        $region81: #{tpu_custom_call.1} parent=75 // pred_check
          %p1126 = pneg %p250
        $region82: #{tpu_custom_call.1} parent=75 // pred_check_branch
          %1128 = sbr.rel (%p1126) target = $region84
        $region83: #{tpu_custom_call.1} parent=75 // pred_region
          %s1129 = sand.u32 %s235, 1
          %s1130 = scalar_lea.sflag [#allocation5], %s1129
          %s1131 = sand.u32 %s235, 1
          %s1132 = smul.addr %s1131, 64
          %s1133 = scalar_lea.vmem [#allocation11], %s1132
          %1135 = dma.done %s1130, 1024
        $region84: #{tpu_custom_call.1} parent=75 // pred_fallthru
          _
      $region76: #{tpu_custom_call.1} parent=5 // pred_fallthru
        _
    $region6: #{tpu_custom_call.1} parent=1 // loop_footer
      %s32 = sadd.s32 1, %s28
    $region7: #{tpu_custom_call.1} parent=1 // loop_footer_branch
      %27 = sbr.rel target = $region3
    $region8: #{tpu_custom_call.1} parent=1 // loop_exit
      _
    %1136 = vsyncpa [#allocation4], 1
    %s1137 = scalar_lea.sflag [#allocation4], 1
    %1138 = vsyncpa %s1137, 1
    %1139 = vsyncpa [#allocation7], 1
    %s1140 = scalar_lea.sflag [#allocation7], 1
    %1141 = vsyncpa %s1140, 1
    %1142 = vsyncpa [#allocation10], 1
    %s1143 = scalar_lea.sflag [#allocation10], 1
    %1144 = vsyncpa %s1143, 1
    %1145 = vsyncpa [#allocation5], 1
    %s1146 = scalar_lea.sflag [#allocation5], 1
    %1147 = vsyncpa %s1146, 1

</llo_original>
